<compile_context>
chip_gen: v7x
topology: tpu7x:2x2x1
jax: 0.10.0
libtpu: 0.0.40
codegen_flags: <defaults>
</compile_context>

<pallas_src>
import jax
import jax.numpy as jnp
from jax.experimental import pallas as pl
from jax.experimental.pallas import tpu as pltpu

_H1 = 64
_H2 = 256
_FC3_CHUNK = 64   # fc2 output rows per inner step (256/64 = 4 static chunks)


def _value_net_kernel(xT_ref, w1_ref, b1_ref, w2_ref, b2_ref, w3T_ref, b3_ref, outT_ref):
    """One batch tile (TB rows, batch on the lane axis).
    xT:(2,TB) w1:(64,2) b1:(64,1) w2:(256,64)[f32|bf16] b2:(256,1) w3T:(256,1)
    b3:(1,) SMEM  out:(1,TB)."""
    tb = xT_ref.shape[1]

    # fc1: contraction depth is only 2 -> two broadcasted VPU FMAs, no MXU round-trip.
    x0 = xT_ref[0:1, :]                                              # (1, TB)
    x1 = xT_ref[1:2, :]                                              # (1, TB)
    h1 = jnp.maximum(w1_ref[:, 0:1] * x0 + w1_ref[:, 1:2] * x1 + b1_ref[...], 0.0)  # (64,TB) f32
    h1d = h1.astype(w2_ref.dtype)      # low-precision MXU operand; accumulation stays f32

    # Hoist the full (small) weight loads out of the chunk loop.
    w2 = w2_ref[...]                   # (256, 64)
    b2 = b2_ref[...]                   # (256, 1)  f32
    w3 = w3T_ref[...]                  # (256, 1)  f32

    # Fused fc2 + ReLU + fc3: never materialize the full (256,TB) h2, and replace
    # the M=1 fc3 MXU pass with a VPU multiply + XLU sublane reduce per chunk.
    out = jnp.zeros((1, tb), jnp.float32)
    for c in range(_H2 // _FC3_CHUNK):                 # static unroll (4 iterations)
        lo, hi = c * _FC3_CHUNK, (c + 1) * _FC3_CHUNK
        h2_c = jnp.dot(w2[lo:hi, :], h1d, preferred_element_type=jnp.float32)
        h2_c = jnp.maximum(h2_c + b2[lo:hi, :], 0.0)                 # (chunk, TB) f32
        out = out + jnp.sum(w3[lo:hi, :] * h2_c, axis=0, keepdims=True)

    outT_ref[...] = (out + b3_ref[0]).astype(outT_ref.dtype)


def _round_up(v, m):
    return ((v + m - 1) // m) * m


def value_network_forward(x, params, *, block_b=2048, dot_dtype=jnp.bfloat16):
    """x: [B, 2] float32; params in PyTorch nn.Linear convention
    (W: (out_features, in_features), b: (out_features,)).  Returns [B, 1] float32.

    block_b  : batch rows per grid tile (tuning knob).  2048-8192 keeps the kernel
               MXU-bound; live intermediates are only a few hundred bytes per row,
               so even 8192 rows stays well inside the explicit 32 MiB VMEM limit
               (safe on v5e / v6e / v7x).  Tiny batches are clamped to one tile.
    dot_dtype: operand dtype of the fc2 MXU dot (accumulation is always f32).
               bf16 gives 2-4x MXU rate on v6e/v7x; pass jnp.float32 for a
               bit-tight comparison against the f32 reference.
    """
    w1, b1, w2, b2, w3, b3 = params
    B = x.shape[0]

    # Clamp the tile for small batches (don't pad B=8 out to 2048 lanes); keep the
    # lane axis a multiple of 128.
    block_b = max(128, min(_round_up(block_b, 128), _round_up(B, 128)))
    nb = pl.cdiv(B, block_b)
    b_pad = nb * block_b

    # Lane-dense layout plumbing (cheap XLA-side work): batch -> lane axis, pad tail.
    xT = jnp.pad(jnp.transpose(x).astype(jnp.float32), ((0, 0), (0, b_pad - B)))

    w1c = w1.astype(jnp.float32)                       # (64, 2)    VPU fc1
    b1c = b1.reshape(-1, 1).astype(jnp.float32)        # (64, 1)
    w2c = w2.astype(dot_dtype)                         # (256, 64)  MXU operand
    b2c = b2.reshape(-1, 1).astype(jnp.float32)        # (256, 1)
    w3c = w3.reshape(-1, 1).astype(jnp.float32)        # (256, 1)   fc3 as VPU column
    b3c = b3.reshape(1).astype(jnp.float32)            # (1,)       SMEM scalar

    def const(shape):
        # Constant block index -> fetched once, stays VMEM-resident across grid steps.
        return pl.BlockSpec(shape, lambda i, _s=len(shape): (0,) * _s)

    outT = pl.pallas_call(
        _value_net_kernel,
        out_shape=jax.ShapeDtypeStruct((1, b_pad), jnp.float32),
        grid=(nb,),
        in_specs=[
            pl.BlockSpec((2, block_b), lambda i: (0, i)),          # x tile (pipelined)
            const(w1c.shape), const(b1c.shape),
            const(w2c.shape), const(b2c.shape),
            const(w3c.shape),
            pl.BlockSpec(memory_space=pltpu.MemorySpace.SMEM),     # scalar bias b3
        ],
        out_specs=pl.BlockSpec((1, block_b), lambda i: (0, i)),    # lane-dense output slab
        compiler_params=pltpu.CompilerParams(
            dimension_semantics=("parallel",),        # v7x: shard batch tiles over both TCs
            vmem_limit_bytes=32 * 1024 * 1024,        # explicit; within every chip's budget
        ),
    )(xT, w1c, b1c, w2c, b2c, w3c, b3c)

    return outT[0, :B].reshape(B, 1)


def reference_forward(x, params):
    """Plain-JAX reference of the same math (PyTorch convention)."""
    w1, b1, w2, b2, w3, b3 = params
    h = jnp.maximum(x @ w1.T + b1, 0.0)
    h = jnp.maximum(h @ w2.T + b2, 0.0)
    return h @ w3.T + b3


def init_params(key):
    """Deterministic synthetic params matching nn.Linear(2,64), (64,256), (256,1),
    stored in PyTorch convention: W (out_features, in_features), b (out_features,)."""
    def linear(k, fan_in, fan_out):
        kw, kb = jax.random.split(k)
        bound = 1.0 / float(fan_in) ** 0.5   # PyTorch default init U(-1/sqrt(fan_in), ...)
        w = jax.random.uniform(kw, (fan_out, fan_in), jnp.float32, -bound, bound)
        b = jax.random.uniform(kb, (fan_out,), jnp.float32, -bound, bound)
        return w, b

    k1, k2, k3 = jax.random.split(key, 3)
    w1, b1 = linear(k1, 2, 64)
    w2, b2 = linear(k2, 64, 256)
    w3, b3 = linear(k3, 256, 1)
    return (w1, b1, w2, b2, w3, b3)


if __name__ == "__main__":
    key = jax.random.PRNGKey(0)
    pkey, xkey = jax.random.split(key)
    params = init_params(pkey)

    # Small demo shape implied by the module: batch=8, state dim=2 (cart-pole).
    x = jax.random.normal(xkey, (8, 2), jnp.float32)
    ref = reference_forward(x, params)

    # Bit-tight path: f32 MXU operands.
    out_f32 = jax.block_until_ready(value_network_forward(x, params, dot_dtype=jnp.float32))
    assert out_f32.shape == (8, 1)
    assert jnp.allclose(out_f32, ref, atol=1e-5, rtol=1e-5), float(jnp.max(jnp.abs(out_f32 - ref)))

    # Default fast path: bf16 MXU operands, f32 accumulation -> looser tolerance.
    out_bf16 = jax.block_until_ready(value_network_forward(x, params))
    assert jnp.allclose(out_bf16, ref, atol=3e-2, rtol=3e-2), float(jnp.max(jnp.abs(out_bf16 - ref)))

    # Multi-tile grid path (batch not a multiple of the tile; small block forces 2 tiles).
    x2 = jax.random.normal(jax.random.split(xkey)[0], (300, 2), jnp.float32)
    ref2 = reference_forward(x2, params)
    out2 = jax.block_until_ready(
        value_network_forward(x2, params, block_b=256, dot_dtype=jnp.float32))
    assert out2.shape == (300, 1)
    assert jnp.allclose(out2, ref2, atol=1e-5, rtol=1e-5), float(jnp.max(jnp.abs(out2 - ref2)))

    # Large-tile rollout path: default block_b=2048 -> two big tiles on the grid.
    x3 = jax.random.normal(jax.random.split(xkey, 3)[2], (2560, 2), jnp.float32)
    ref3 = reference_forward(x3, params)
    out3 = jax.block_until_ready(value_network_forward(x3, params))
    assert out3.shape == (2560, 1)
    assert jnp.allclose(out3, ref3, atol=3e-2, rtol=3e-2), float(jnp.max(jnp.abs(out3 - ref3)))

    print("KERNEL_OK")
</pallas_src>

<mosaic_0001>
module attributes {stable_mosaic.version = 11 : i64} {
  func.func @_value_net_kernel(%arg0: i32, %arg1: memref<2x128xf32, #tpu.memory_space<vmem>>, %arg2: memref<64x2xf32, #tpu.memory_space<vmem>>, %arg3: memref<64x1xf32, #tpu.memory_space<vmem>>, %arg4: memref<256x64xf32, #tpu.memory_space<vmem>>, %arg5: memref<256x1xf32, #tpu.memory_space<vmem>>, %arg6: memref<256x1xf32, #tpu.memory_space<vmem>>, %arg7: memref<1xf32, #tpu.memory_space<smem>>, %arg8: memref<1x128xf32, #tpu.memory_space<vmem>>) attributes {dimension_semantics = [#tpu.dimension_semantics<parallel>], iteration_bounds = array<i64: 1>, scalar_prefetch = 0 : i64, scratch_operands = 0 : i64, tpu.core_type = #tpu.core_type<tc>, window_params = [{transform_indices = @transform_0, window_bounds = array<i64: 2, 128>}, {pipeline_mode = #tpu.pipeline_mode<synchronous>, transform_indices = @transform_1, window_bounds = array<i64: 64, 2>}, {pipeline_mode = #tpu.pipeline_mode<synchronous>, transform_indices = @transform_2, window_bounds = array<i64: 64, 1>}, {pipeline_mode = #tpu.pipeline_mode<synchronous>, transform_indices = @transform_3, window_bounds = array<i64: 256, 64>}, {pipeline_mode = #tpu.pipeline_mode<synchronous>, transform_indices = @transform_4, window_bounds = array<i64: 256, 1>}, {pipeline_mode = #tpu.pipeline_mode<synchronous>, transform_indices = @transform_5, window_bounds = array<i64: 256, 1>}, {transform_indices = @transform_6, window_bounds = array<i64: 1>}, {transform_indices = @transform_7, window_bounds = array<i64: 1, 128>}]} {
    %c0 = arith.constant 0 : index
    %c0_0 = arith.constant 0 : index
    %0 = vector.load %arg1[%c0, %c0_0] : memref<2x128xf32, #tpu.memory_space<vmem>>, vector<1x128xf32>
    %c1 = arith.constant 1 : index
    %c0_1 = arith.constant 0 : index
    %1 = vector.load %arg1[%c1, %c0_1] : memref<2x128xf32, #tpu.memory_space<vmem>>, vector<1x128xf32>
    %c0_2 = arith.constant 0 : index
    %c0_3 = arith.constant 0 : index
    %2 = vector.load %arg2[%c0_2, %c0_3] : memref<64x2xf32, #tpu.memory_space<vmem>>, vector<64x1xf32>
    %3 = vector.broadcast %2 : vector<64x1xf32> to vector<64x128xf32>
    %4 = vector.broadcast %0 : vector<1x128xf32> to vector<64x128xf32>
    %5 = arith.mulf %3, %4 : vector<64x128xf32>
    %c0_4 = arith.constant 0 : index
    %c1_5 = arith.constant 1 : index
    %6 = vector.load %arg2[%c0_4, %c1_5] : memref<64x2xf32, #tpu.memory_space<vmem>>, vector<64x1xf32>
    %7 = vector.broadcast %6 : vector<64x1xf32> to vector<64x128xf32>
    %8 = vector.broadcast %1 : vector<1x128xf32> to vector<64x128xf32>
    %9 = arith.mulf %7, %8 : vector<64x128xf32>
    %10 = arith.addf %5, %9 : vector<64x128xf32>
    %c0_6 = arith.constant 0 : index
    %c0_7 = arith.constant 0 : index
    %11 = vector.load %arg3[%c0_6, %c0_7] : memref<64x1xf32, #tpu.memory_space<vmem>>, vector<64x1xf32>
    %12 = vector.broadcast %11 : vector<64x1xf32> to vector<64x128xf32>
    %13 = arith.addf %10, %12 : vector<64x128xf32>
    %cst = arith.constant 0.000000e+00 : f32
    %14 = vector.broadcast %cst : f32 to vector<64x128xf32>
    %15 = arith.maximumf %13, %14 : vector<64x128xf32>
    %c0_8 = arith.constant 0 : index
    %c0_9 = arith.constant 0 : index
    %16 = vector.load %arg4[%c0_8, %c0_9] : memref<256x64xf32, #tpu.memory_space<vmem>>, vector<256x64xf32>
    %c0_10 = arith.constant 0 : index
    %c0_11 = arith.constant 0 : index
    %17 = vector.load %arg5[%c0_10, %c0_11] : memref<256x1xf32, #tpu.memory_space<vmem>>, vector<256x1xf32>
    %c0_12 = arith.constant 0 : index
    %c0_13 = arith.constant 0 : index
    %18 = vector.load %arg6[%c0_12, %c0_13] : memref<256x1xf32, #tpu.memory_space<vmem>>, vector<256x1xf32>
    %cst_14 = arith.constant 0.000000e+00 : f32
    %19 = vector.broadcast %cst_14 : f32 to vector<1x128xf32>
    %20 = vector.extract_strided_slice %16 {offsets = [0, 0], sizes = [64, 64], strides = [1, 1]} : vector<256x64xf32> to vector<64x64xf32>
    %cst_15 = arith.constant dense<0.000000e+00> : vector<64x128xf32>
    %21 = tpu.matmul %20, %15, %cst_15 {dimension_numbers = #tpu.dot_dimension_numbers<[1], [0], [0], [1], [0, 0, 1, 1], [], []>} : vector<64x64xf32>, vector<64x128xf32>, vector<64x128xf32> -> vector<64x128xf32>
    %22 = vector.extract_strided_slice %17 {offsets = [0, 0], sizes = [64, 1], strides = [1, 1]} : vector<256x1xf32> to vector<64x1xf32>
    %23 = vector.broadcast %22 : vector<64x1xf32> to vector<64x128xf32>
    %24 = arith.addf %21, %23 : vector<64x128xf32>
    %cst_16 = arith.constant 0.000000e+00 : f32
    %25 = vector.broadcast %cst_16 : f32 to vector<64x128xf32>
    %26 = arith.maximumf %24, %25 : vector<64x128xf32>
    %27 = vector.extract_strided_slice %18 {offsets = [0, 0], sizes = [64, 1], strides = [1, 1]} : vector<256x1xf32> to vector<64x1xf32>
    %28 = vector.broadcast %27 : vector<64x1xf32> to vector<64x128xf32>
    %29 = arith.mulf %28, %26 : vector<64x128xf32>
    %cst_17 = arith.constant dense<0.000000e+00> : vector<128xf32>
    %30 = vector.multi_reduction <add>, %29, %cst_17 [0] : vector<64x128xf32> to vector<128xf32>
    %31 = vector.shape_cast %30 : vector<128xf32> to vector<1x128xf32>
    %32 = arith.addf %19, %31 : vector<1x128xf32>
    %33 = vector.extract_strided_slice %16 {offsets = [64, 0], sizes = [64, 64], strides = [1, 1]} : vector<256x64xf32> to vector<64x64xf32>
    %cst_18 = arith.constant dense<0.000000e+00> : vector<64x128xf32>
    %34 = tpu.matmul %33, %15, %cst_18 {dimension_numbers = #tpu.dot_dimension_numbers<[1], [0], [0], [1], [0, 0, 1, 1], [], []>} : vector<64x64xf32>, vector<64x128xf32>, vector<64x128xf32> -> vector<64x128xf32>
    %35 = vector.extract_strided_slice %17 {offsets = [64, 0], sizes = [64, 1], strides = [1, 1]} : vector<256x1xf32> to vector<64x1xf32>
    %36 = vector.broadcast %35 : vector<64x1xf32> to vector<64x128xf32>
    %37 = arith.addf %34, %36 : vector<64x128xf32>
    %cst_19 = arith.constant 0.000000e+00 : f32
    %38 = vector.broadcast %cst_19 : f32 to vector<64x128xf32>
    %39 = arith.maximumf %37, %38 : vector<64x128xf32>
    %40 = vector.extract_strided_slice %18 {offsets = [64, 0], sizes = [64, 1], strides = [1, 1]} : vector<256x1xf32> to vector<64x1xf32>
    %41 = vector.broadcast %40 : vector<64x1xf32> to vector<64x128xf32>
    %42 = arith.mulf %41, %39 : vector<64x128xf32>
    %cst_20 = arith.constant dense<0.000000e+00> : vector<128xf32>
    %43 = vector.multi_reduction <add>, %42, %cst_20 [0] : vector<64x128xf32> to vector<128xf32>
    %44 = vector.shape_cast %43 : vector<128xf32> to vector<1x128xf32>
    %45 = arith.addf %32, %44 : vector<1x128xf32>
    %46 = vector.extract_strided_slice %16 {offsets = [128, 0], sizes = [64, 64], strides = [1, 1]} : vector<256x64xf32> to vector<64x64xf32>
    %cst_21 = arith.constant dense<0.000000e+00> : vector<64x128xf32>
    %47 = tpu.matmul %46, %15, %cst_21 {dimension_numbers = #tpu.dot_dimension_numbers<[1], [0], [0], [1], [0, 0, 1, 1], [], []>} : vector<64x64xf32>, vector<64x128xf32>, vector<64x128xf32> -> vector<64x128xf32>
    %48 = vector.extract_strided_slice %17 {offsets = [128, 0], sizes = [64, 1], strides = [1, 1]} : vector<256x1xf32> to vector<64x1xf32>
    %49 = vector.broadcast %48 : vector<64x1xf32> to vector<64x128xf32>
    %50 = arith.addf %47, %49 : vector<64x128xf32>
    %cst_22 = arith.constant 0.000000e+00 : f32
    %51 = vector.broadcast %cst_22 : f32 to vector<64x128xf32>
    %52 = arith.maximumf %50, %51 : vector<64x128xf32>
    %53 = vector.extract_strided_slice %18 {offsets = [128, 0], sizes = [64, 1], strides = [1, 1]} : vector<256x1xf32> to vector<64x1xf32>
    %54 = vector.broadcast %53 : vector<64x1xf32> to vector<64x128xf32>
    %55 = arith.mulf %54, %52 : vector<64x128xf32>
    %cst_23 = arith.constant dense<0.000000e+00> : vector<128xf32>
    %56 = vector.multi_reduction <add>, %55, %cst_23 [0] : vector<64x128xf32> to vector<128xf32>
    %57 = vector.shape_cast %56 : vector<128xf32> to vector<1x128xf32>
    %58 = arith.addf %45, %57 : vector<1x128xf32>
    %59 = vector.extract_strided_slice %16 {offsets = [192, 0], sizes = [64, 64], strides = [1, 1]} : vector<256x64xf32> to vector<64x64xf32>
    %cst_24 = arith.constant dense<0.000000e+00> : vector<64x128xf32>
    %60 = tpu.matmul %59, %15, %cst_24 {dimension_numbers = #tpu.dot_dimension_numbers<[1], [0], [0], [1], [0, 0, 1, 1], [], []>} : vector<64x64xf32>, vector<64x128xf32>, vector<64x128xf32> -> vector<64x128xf32>
    %61 = vector.extract_strided_slice %17 {offsets = [192, 0], sizes = [64, 1], strides = [1, 1]} : vector<256x1xf32> to vector<64x1xf32>
    %62 = vector.broadcast %61 : vector<64x1xf32> to vector<64x128xf32>
    %63 = arith.addf %60, %62 : vector<64x128xf32>
    %cst_25 = arith.constant 0.000000e+00 : f32
    %64 = vector.broadcast %cst_25 : f32 to vector<64x128xf32>
    %65 = arith.maximumf %63, %64 : vector<64x128xf32>
    %66 = vector.extract_strided_slice %18 {offsets = [192, 0], sizes = [64, 1], strides = [1, 1]} : vector<256x1xf32> to vector<64x1xf32>
    %67 = vector.broadcast %66 : vector<64x1xf32> to vector<64x128xf32>
    %68 = arith.mulf %67, %65 : vector<64x128xf32>
    %cst_26 = arith.constant dense<0.000000e+00> : vector<128xf32>
    %69 = vector.multi_reduction <add>, %68, %cst_26 [0] : vector<64x128xf32> to vector<128xf32>
    %70 = vector.shape_cast %69 : vector<128xf32> to vector<1x128xf32>
    %71 = arith.addf %58, %70 : vector<1x128xf32>
    %c0_27 = arith.constant 0 : index
    %72 = memref.load %arg7[%c0_27] : memref<1xf32, #tpu.memory_space<smem>>
    %73 = vector.broadcast %72 : f32 to vector<1x128xf32>
    %74 = arith.addf %71, %73 : vector<1x128xf32>
    %c0_28 = arith.constant 0 : index
    %c0_29 = arith.constant 0 : index
    %75 = vector.load %arg8[%c0_28, %c0_29] : memref<1x128xf32, #tpu.memory_space<vmem>>, vector<1x128xf32>
    tpu.vector_store %arg8[%c0_28, %c0_29], %74 {strides = array<i32>} : memref<1x128xf32, #tpu.memory_space<vmem>>, vector<1x128xf32>,
    return
  }
  func.func @transform_0(%arg0: i32) -> (i32, i32) {
    %c0_i32 = arith.constant 0 : i32
    %c0_i32_0 = arith.constant 0 : i32
    return %c0_i32, %arg0 : i32, i32
  }
  func.func @transform_1(%arg0: i32) -> (i32, i32) {
    %c0_i32 = arith.constant 0 : i32
    %c0_i32_0 = arith.constant 0 : i32
    %c0_i32_1 = arith.constant 0 : i32
    return %c0_i32, %c0_i32_0 : i32, i32
  }
  func.func @transform_2(%arg0: i32) -> (i32, i32) {
    %c0_i32 = arith.constant 0 : i32
    %c0_i32_0 = arith.constant 0 : i32
    %c0_i32_1 = arith.constant 0 : i32
    return %c0_i32, %c0_i32_0 : i32, i32
  }
  func.func @transform_3(%arg0: i32) -> (i32, i32) {
    %c0_i32 = arith.constant 0 : i32
    %c0_i32_0 = arith.constant 0 : i32
    %c0_i32_1 = arith.constant 0 : i32
    return %c0_i32, %c0_i32_0 : i32, i32
  }
  func.func @transform_4(%arg0: i32) -> (i32, i32) {
    %c0_i32 = arith.constant 0 : i32
    %c0_i32_0 = arith.constant 0 : i32
    %c0_i32_1 = arith.constant 0 : i32
    return %c0_i32, %c0_i32_0 : i32, i32
  }
  func.func @transform_5(%arg0: i32) -> (i32, i32) {
    %c0_i32 = arith.constant 0 : i32
    %c0_i32_0 = arith.constant 0 : i32
    %c0_i32_1 = arith.constant 0 : i32
    return %c0_i32, %c0_i32_0 : i32, i32
  }
  func.func @transform_6(%arg0: i32) -> i32 {
    %c0_i32 = arith.constant 0 : i32
    %c0_i32_0 = arith.constant 0 : i32
    return %c0_i32 : i32
  }
  func.func @transform_7(%arg0: i32) -> (i32, i32) {
    %c0_i32 = arith.constant 0 : i32
    %c0_i32_0 = arith.constant 0 : i32
    return %c0_i32, %arg0 : i32, i32
  }
}

</mosaic_0001>

<llo_original>
// kernel: tpu_custom_call.1
$region0: #{tpu_custom_call.1}
  #allocation0 [shape = 'u32[]', space=smem, size = 0x4, offset = 0x4, fixed_abs, tag = 'smem constant byte address 0x4 - core index']
  #allocation1 [shape = 'u32[144,128]{1,0:T(1,128)}', space=vmem, size = 0x12000, scoped, tag = 'internal scratch']
  #allocation2 [shape = 'f32[1]{0:T(128)S(6)}', space=smem, size = 0x200, scoped, tag = 'scoped memory for tpu_custom_call.1']
  %s0 = inlined_call_operand.vmem [shape: f32[2,128], index: 0, kind: input, shape index: {}]
  %s1 = inlined_call_operand.vmem [shape: f32[64,2], index: 1, kind: input, shape index: {}]
  %s2 = inlined_call_operand.vmem [shape: f32[64,1], index: 2, kind: input, shape index: {}]
  %s3 = inlined_call_operand.vmem [shape: f32[256,64], index: 3, kind: input, shape index: {}]
  %s4 = inlined_call_operand.vmem [shape: f32[256,1], index: 4, kind: input, shape index: {}]
  %s5 = inlined_call_operand.vmem [shape: f32[256,1], index: 5, kind: input, shape index: {}]
  %s6 = inlined_call_operand.<no memory space> [shape: f32[1], index: 6, kind: input, shape index: {}]
  %s7 = inlined_call_operand.hbm [shape: f32[1,128], index: 7, kind: output, shape index: {}]
  %s8 = sld [smem:[#allocation0]]
  $region38: #{tpu_custom_call.1} parent=0
    _
  %s10 = ssub.s32 1, %s8
  %s11 = scalar_select 0, %s10, %s8
  %12 = sst [smem:[#allocation2]] %s6
  $region1: #{tpu_custom_call.1} parent=0
    #allocation3 [shape = 'u8[512]{0}', space=vmem, size = 0x400, scoped, tag = 'output window, operand 0, single buffered']
    #allocation4 [shape = 's32[1]{0}', space=sflag, size = 0x4, scoped, tag = 'scoped memory for tpu_custom_call.1']
    %13 = vsyncpa [#allocation4], 0
    // Predicated region
    $region2: #{tpu_custom_call.1} parent=1 // pred_check
      _
    $region3: #{tpu_custom_call.1} parent=1 // pred_check_branch
      %15 = sbr.rel (0) target = $region5
    $region4: #{tpu_custom_call.1} parent=1 // pred_region
      _
    $region5: #{tpu_custom_call.1} parent=1 // pred_fallthru
      _
    // Predicated region
    $region6: #{tpu_custom_call.1} parent=1 // pred_check
      _
    $region7: #{tpu_custom_call.1} parent=1 // pred_check_branch
      %17 = sbr.rel (0) target = $region9
    $region8: #{tpu_custom_call.1} parent=1 // pred_region
      _
    $region9: #{tpu_custom_call.1} parent=1 // pred_fallthru
      _
    // Predicated region
    $region10: #{tpu_custom_call.1} parent=1 // pred_check
      _
    $region11: #{tpu_custom_call.1} parent=1 // pred_check_branch
      %19 = sbr.rel (0) target = $region13
    $region12: #{tpu_custom_call.1} parent=1 // pred_region
      _
    $region13: #{tpu_custom_call.1} parent=1 // pred_fallthru
      _
    // Predicated region
    $region14: #{tpu_custom_call.1} parent=1 // pred_check
      _
    $region15: #{tpu_custom_call.1} parent=1 // pred_check_branch
      %21 = sbr.rel (0) target = $region17
    $region16: #{tpu_custom_call.1} parent=1 // pred_region
      _
    $region17: #{tpu_custom_call.1} parent=1 // pred_fallthru
      _
    // Predicated region
    $region18: #{tpu_custom_call.1} parent=1 // pred_check
      _
    $region19: #{tpu_custom_call.1} parent=1 // pred_check_branch
      %23 = sbr.rel (0) target = $region21
    $region20: #{tpu_custom_call.1} parent=1 // pred_region
      _
    $region21: #{tpu_custom_call.1} parent=1 // pred_fallthru
      _
    // Predicated region
    $region22: #{tpu_custom_call.1} parent=1 // pred_check
      _
    $region23: #{tpu_custom_call.1} parent=1 // pred_check_branch
      %25 = sbr.rel (0) target = $region25
    $region24: #{tpu_custom_call.1} parent=1 // pred_region
      _
    $region25: #{tpu_custom_call.1} parent=1 // pred_fallthru
      _
    // Predicated region
    $region26: #{tpu_custom_call.1} parent=1 // pred_check
      _
    $region27: #{tpu_custom_call.1} parent=1 // pred_check_branch
      %27 = sbr.rel (0) target = $region29
    $region28: #{tpu_custom_call.1} parent=1 // pred_region
      _
    $region29: #{tpu_custom_call.1} parent=1 // pred_fallthru
      _
    %v28 = vld [vmem:[%s0] sm:$0x1]
    %v29 = vld [vmem:[%s0 + $0x1] sm:$0x1]
    %v30 = vld [vmem:[%s1] sm:$0xff]
    %v31 = vld [vmem:[%s1 + $0x8] sm:$0xff]
    %v32 = vld [vmem:[%s1 + $0x10] sm:$0xff]
    %v33 = vld [vmem:[%s1 + $0x18] sm:$0xff]
    %v34 = vld [vmem:[%s1 + $0x20] sm:$0xff]
    %v35 = vld [vmem:[%s1 + $0x28] sm:$0xff]
    %v36 = vld [vmem:[%s1 + $0x30] sm:$0xff]
    %v37 = vld [vmem:[%s1 + $0x38] sm:$0xff]
    %39 = vset.pattern.permute.xlu0 0
    %40 = vperm.xlu0 %39, %v30
    %v41 = vpop.permute.xlu0 %40
    %44 = vset.pattern.permute.xlu0 0
    %45 = vperm.xlu0 %44, %v31
    %v46 = vpop.permute.xlu0 %45
    %49 = vset.pattern.permute.xlu0 0
    %50 = vperm.xlu0 %49, %v32
    %v51 = vpop.permute.xlu0 %50
    %54 = vset.pattern.permute.xlu0 0
    %55 = vperm.xlu0 %54, %v33
    %v56 = vpop.permute.xlu0 %55
    %59 = vset.pattern.permute.xlu0 0
    %60 = vperm.xlu0 %59, %v34
    %v61 = vpop.permute.xlu0 %60
    %64 = vset.pattern.permute.xlu0 0
    %65 = vperm.xlu0 %64, %v35
    %v66 = vpop.permute.xlu0 %65
    %69 = vset.pattern.permute.xlu0 0
    %70 = vperm.xlu0 %69, %v36
    %v71 = vpop.permute.xlu0 %70
    %74 = vset.pattern.permute.xlu0 0
    %75 = vperm.xlu0 %74, %v37
    %v76 = vpop.permute.xlu0 %75
    %v78 = vlaneseq
    %v79 = vshrl.u32 %v78, 7
    %v80 = vsub.s32 0, %v79
    %v81 = vrot.slane %v28, %v80
    %v82 = vmul.f32 %v41, %v81
    %v83 = vmul.f32 %v46, %v81
    %v84 = vmul.f32 %v51, %v81
    %v85 = vmul.f32 %v56, %v81
    %v86 = vmul.f32 %v61, %v81
    %v87 = vmul.f32 %v66, %v81
    %v88 = vmul.f32 %v71, %v81
    %v89 = vmul.f32 %v76, %v81
    %90 = vset.pattern.permute.xlu0 1
    %91 = vperm.xlu0 %90, %v30
    %v92 = vpop.permute.xlu0 %91
    %94 = vset.pattern.permute.xlu0 1
    %95 = vperm.xlu0 %94, %v31
    %v96 = vpop.permute.xlu0 %95
    %98 = vset.pattern.permute.xlu0 1
    %99 = vperm.xlu0 %98, %v32
    %v100 = vpop.permute.xlu0 %99
    %102 = vset.pattern.permute.xlu0 1
    %103 = vperm.xlu0 %102, %v33
    %v104 = vpop.permute.xlu0 %103
    %106 = vset.pattern.permute.xlu0 1
    %107 = vperm.xlu0 %106, %v34
    %v108 = vpop.permute.xlu0 %107
    %110 = vset.pattern.permute.xlu0 1
    %111 = vperm.xlu0 %110, %v35
    %v112 = vpop.permute.xlu0 %111
    %114 = vset.pattern.permute.xlu0 1
    %115 = vperm.xlu0 %114, %v36
    %v116 = vpop.permute.xlu0 %115
    %118 = vset.pattern.permute.xlu0 1
    %119 = vperm.xlu0 %118, %v37
    %v120 = vpop.permute.xlu0 %119
    %v122 = vlaneseq
    %v123 = vshrl.u32 %v122, 7
    %v124 = vsub.s32 0, %v123
    %v125 = vrot.slane %v29, %v124
    %v126 = vmul.f32 %v92, %v125
    %v127 = vmul.f32 %v96, %v125
    %v128 = vmul.f32 %v100, %v125
    %v129 = vmul.f32 %v104, %v125
    %v130 = vmul.f32 %v108, %v125
    %v131 = vmul.f32 %v112, %v125
    %v132 = vmul.f32 %v116, %v125
    %v133 = vmul.f32 %v120, %v125
    %v134 = vadd.f32 %v82, %v126
    %v135 = vadd.f32 %v83, %v127
    %v136 = vadd.f32 %v84, %v128
    %v137 = vadd.f32 %v85, %v129
    %v138 = vadd.f32 %v86, %v130
    %v139 = vadd.f32 %v87, %v131
    %v140 = vadd.f32 %v88, %v132
    %v141 = vadd.f32 %v89, %v133
    %v142 = vld [vmem:[%s2] sm:$0xff]
    %v143 = vld [vmem:[%s2 + $0x8] sm:$0xff]
    %v144 = vld [vmem:[%s2 + $0x10] sm:$0xff]
    %v145 = vld [vmem:[%s2 + $0x18] sm:$0xff]
    %v146 = vld [vmem:[%s2 + $0x20] sm:$0xff]
    %v147 = vld [vmem:[%s2 + $0x28] sm:$0xff]
    %v148 = vld [vmem:[%s2 + $0x30] sm:$0xff]
    %v149 = vld [vmem:[%s2 + $0x38] sm:$0xff]
    %151 = vset.pattern.permute.xlu0 0
    %152 = vperm.xlu0 %151, %v142
    %v153 = vpop.permute.xlu0 %152
    %156 = vset.pattern.permute.xlu0 0
    %157 = vperm.xlu0 %156, %v143
    %v158 = vpop.permute.xlu0 %157
    %161 = vset.pattern.permute.xlu0 0
    %162 = vperm.xlu0 %161, %v144
    %v163 = vpop.permute.xlu0 %162
    %166 = vset.pattern.permute.xlu0 0
    %167 = vperm.xlu0 %166, %v145
    %v168 = vpop.permute.xlu0 %167
    %171 = vset.pattern.permute.xlu0 0
    %172 = vperm.xlu0 %171, %v146
    %v173 = vpop.permute.xlu0 %172
    %176 = vset.pattern.permute.xlu0 0
    %177 = vperm.xlu0 %176, %v147
    %v178 = vpop.permute.xlu0 %177
    %181 = vset.pattern.permute.xlu0 0
    %182 = vperm.xlu0 %181, %v148
    %v183 = vpop.permute.xlu0 %182
    %186 = vset.pattern.permute.xlu0 0
    %187 = vperm.xlu0 %186, %v149
    %v188 = vpop.permute.xlu0 %187
    %v190 = vadd.f32 %v134, %v153
    %v191 = vadd.f32 %v135, %v158
    %v192 = vadd.f32 %v136, %v163
    %v193 = vadd.f32 %v137, %v168
    %v194 = vadd.f32 %v138, %v173
    %v195 = vadd.f32 %v139, %v178
    %v196 = vadd.f32 %v140, %v183
    %v197 = vadd.f32 %v141, %v188
    %v198 = vmax.f32 %v190, 0.0
    %v199 = vmax.f32 %v191, 0.0
    %v200 = vmax.f32 %v192, 0.0
    %v201 = vmax.f32 %v193, 0.0
    %v202 = vmax.f32 %v194, 0.0
    %v203 = vmax.f32 %v195, 0.0
    %v204 = vmax.f32 %v196, 0.0
    %v205 = vmax.f32 %v197, 0.0
    %v206 = vld [vmem:[%s3] sm:$0xff]
    %v207 = vld [vmem:[%s3 + $0x8] sm:$0xff]
    %v208 = vld [vmem:[%s3 + $0x10] sm:$0xff]
    %v209 = vld [vmem:[%s3 + $0x18] sm:$0xff]
    %v210 = vld [vmem:[%s3 + $0x20] sm:$0xff]
    %v211 = vld [vmem:[%s3 + $0x28] sm:$0xff]
    %v212 = vld [vmem:[%s3 + $0x30] sm:$0xff]
    %v213 = vld [vmem:[%s3 + $0x38] sm:$0xff]
    %v214 = vld [vmem:[%s3 + $0x40] sm:$0xff]
    %v215 = vld [vmem:[%s3 + $0x48] sm:$0xff]
    %v216 = vld [vmem:[%s3 + $0x50] sm:$0xff]
    %v217 = vld [vmem:[%s3 + $0x58] sm:$0xff]
    %v218 = vld [vmem:[%s3 + $0x60] sm:$0xff]
    %v219 = vld [vmem:[%s3 + $0x68] sm:$0xff]
    %v220 = vld [vmem:[%s3 + $0x70] sm:$0xff]
    %v221 = vld [vmem:[%s3 + $0x78] sm:$0xff]
    %v222 = vld [vmem:[%s3 + $0x80] sm:$0xff]
    %v223 = vld [vmem:[%s3 + $0x88] sm:$0xff]
    %v224 = vld [vmem:[%s3 + $0x90] sm:$0xff]
    %v225 = vld [vmem:[%s3 + $0x98] sm:$0xff]
    %v226 = vld [vmem:[%s3 + $0xa0] sm:$0xff]
    %v227 = vld [vmem:[%s3 + $0xa8] sm:$0xff]
    %v228 = vld [vmem:[%s3 + $0xb0] sm:$0xff]
    %v229 = vld [vmem:[%s3 + $0xb8] sm:$0xff]
    %v230 = vld [vmem:[%s3 + $0xc0] sm:$0xff]
    %v231 = vld [vmem:[%s3 + $0xc8] sm:$0xff]
    %v232 = vld [vmem:[%s3 + $0xd0] sm:$0xff]
    %v233 = vld [vmem:[%s3 + $0xd8] sm:$0xff]
    %v234 = vld [vmem:[%s3 + $0xe0] sm:$0xff]
    %v235 = vld [vmem:[%s3 + $0xe8] sm:$0xff]
    %v236 = vld [vmem:[%s3 + $0xf0] sm:$0xff]
    %v237 = vld [vmem:[%s3 + $0xf8] sm:$0xff]
    %v238 = vld [vmem:[%s4] sm:$0xff]
    %v239 = vld [vmem:[%s4 + $0x8] sm:$0xff]
    %v240 = vld [vmem:[%s4 + $0x10] sm:$0xff]
    %v241 = vld [vmem:[%s4 + $0x18] sm:$0xff]
    %v242 = vld [vmem:[%s4 + $0x20] sm:$0xff]
    %v243 = vld [vmem:[%s4 + $0x28] sm:$0xff]
    %v244 = vld [vmem:[%s4 + $0x30] sm:$0xff]
    %v245 = vld [vmem:[%s4 + $0x38] sm:$0xff]
    %v246 = vld [vmem:[%s4 + $0x40] sm:$0xff]
    %v247 = vld [vmem:[%s4 + $0x48] sm:$0xff]
    %v248 = vld [vmem:[%s4 + $0x50] sm:$0xff]
    %v249 = vld [vmem:[%s4 + $0x58] sm:$0xff]
    %v250 = vld [vmem:[%s4 + $0x60] sm:$0xff]
    %v251 = vld [vmem:[%s4 + $0x68] sm:$0xff]
    %v252 = vld [vmem:[%s4 + $0x70] sm:$0xff]
    %v253 = vld [vmem:[%s4 + $0x78] sm:$0xff]
    %v254 = vld [vmem:[%s4 + $0x80] sm:$0xff]
    %v255 = vld [vmem:[%s4 + $0x88] sm:$0xff]
    %v256 = vld [vmem:[%s4 + $0x90] sm:$0xff]
    %v257 = vld [vmem:[%s4 + $0x98] sm:$0xff]
    %v258 = vld [vmem:[%s4 + $0xa0] sm:$0xff]
    %v259 = vld [vmem:[%s4 + $0xa8] sm:$0xff]
    %v260 = vld [vmem:[%s4 + $0xb0] sm:$0xff]
    %v261 = vld [vmem:[%s4 + $0xb8] sm:$0xff]
    %v262 = vld [vmem:[%s4 + $0xc0] sm:$0xff]
    %v263 = vld [vmem:[%s4 + $0xc8] sm:$0xff]
    %v264 = vld [vmem:[%s4 + $0xd0] sm:$0xff]
    %v265 = vld [vmem:[%s4 + $0xd8] sm:$0xff]
    %v266 = vld [vmem:[%s4 + $0xe0] sm:$0xff]
    %v267 = vld [vmem:[%s4 + $0xe8] sm:$0xff]
    %v268 = vld [vmem:[%s4 + $0xf0] sm:$0xff]
    %v269 = vld [vmem:[%s4 + $0xf8] sm:$0xff]
    %v270 = vld [vmem:[%s5] sm:$0xff]
    %v271 = vld [vmem:[%s5 + $0x8] sm:$0xff]
    %v272 = vld [vmem:[%s5 + $0x10] sm:$0xff]
    %v273 = vld [vmem:[%s5 + $0x18] sm:$0xff]
    %v274 = vld [vmem:[%s5 + $0x20] sm:$0xff]
    %v275 = vld [vmem:[%s5 + $0x28] sm:$0xff]
    %v276 = vld [vmem:[%s5 + $0x30] sm:$0xff]
    %v277 = vld [vmem:[%s5 + $0x38] sm:$0xff]
    %v278 = vld [vmem:[%s5 + $0x40] sm:$0xff]
    %v279 = vld [vmem:[%s5 + $0x48] sm:$0xff]
    %v280 = vld [vmem:[%s5 + $0x50] sm:$0xff]
    %v281 = vld [vmem:[%s5 + $0x58] sm:$0xff]
    %v282 = vld [vmem:[%s5 + $0x60] sm:$0xff]
    %v283 = vld [vmem:[%s5 + $0x68] sm:$0xff]
    %v284 = vld [vmem:[%s5 + $0x70] sm:$0xff]
    %v285 = vld [vmem:[%s5 + $0x78] sm:$0xff]
    %v286 = vld [vmem:[%s5 + $0x80] sm:$0xff]
    %v287 = vld [vmem:[%s5 + $0x88] sm:$0xff]
    %v288 = vld [vmem:[%s5 + $0x90] sm:$0xff]
    %v289 = vld [vmem:[%s5 + $0x98] sm:$0xff]
    %v290 = vld [vmem:[%s5 + $0xa0] sm:$0xff]
    %v291 = vld [vmem:[%s5 + $0xa8] sm:$0xff]
    %v292 = vld [vmem:[%s5 + $0xb0] sm:$0xff]
    %v293 = vld [vmem:[%s5 + $0xb8] sm:$0xff]
    %v294 = vld [vmem:[%s5 + $0xc0] sm:$0xff]
    %v295 = vld [vmem:[%s5 + $0xc8] sm:$0xff]
    %v296 = vld [vmem:[%s5 + $0xd0] sm:$0xff]
    %v297 = vld [vmem:[%s5 + $0xd8] sm:$0xff]
    %v298 = vld [vmem:[%s5 + $0xe0] sm:$0xff]
    %v299 = vld [vmem:[%s5 + $0xe8] sm:$0xff]
    %v300 = vld [vmem:[%s5 + $0xf0] sm:$0xff]
    %v301 = vld [vmem:[%s5 + $0xf8] sm:$0xff]
    %303 = vset.pattern.permute.xlu0 0
    %304 = vperm.xlu0 %303, %v238
    %v305 = vpop.permute.xlu0 %304
    %308 = vset.pattern.permute.xlu0 0
    %309 = vperm.xlu0 %308, %v239
    %v310 = vpop.permute.xlu0 %309
    %313 = vset.pattern.permute.xlu0 0
    %314 = vperm.xlu0 %313, %v240
    %v315 = vpop.permute.xlu0 %314
    %318 = vset.pattern.permute.xlu0 0
    %319 = vperm.xlu0 %318, %v241
    %v320 = vpop.permute.xlu0 %319
    %323 = vset.pattern.permute.xlu0 0
    %324 = vperm.xlu0 %323, %v242
    %v325 = vpop.permute.xlu0 %324
    %328 = vset.pattern.permute.xlu0 0
    %329 = vperm.xlu0 %328, %v243
    %v330 = vpop.permute.xlu0 %329
    %333 = vset.pattern.permute.xlu0 0
    %334 = vperm.xlu0 %333, %v244
    %v335 = vpop.permute.xlu0 %334
    %338 = vset.pattern.permute.xlu0 0
    %339 = vperm.xlu0 %338, %v245
    %v340 = vpop.permute.xlu0 %339
    %vm342 = vcmask 523264
    %v344 = vsel %vm342, %v206, 0
    %v347 = vsel %vm342, %v207, 0
    %v350 = vsel %vm342, %v208, 0
    %v353 = vsel %vm342, %v209, 0
    %v356 = vsel %vm342, %v210, 0
    %v359 = vsel %vm342, %v211, 0
    %v362 = vsel %vm342, %v212, 0
    %v365 = vsel %vm342, %v213, 0
    %367 = vmatprep.subr.mxu0 0.0
    %368 = vmatpush1.msra.mxu0 %v198
    %369 = vmatprep.subr.mxu0 0.0
    %370 = vmatpush1.msra.mxu0 %v199
    %371 = vmatprep.subr.mxu0 0.0
    %372 = vmatpush1.msra.mxu0 %v200
    %373 = vmatprep.subr.mxu0 0.0
    %374 = vmatpush1.msra.mxu0 %v201
    %375 = vmatprep.subr.mxu0 0.0
    %376 = vmatpush1.msra.mxu0 %v202
    %377 = vmatprep.subr.mxu0 0.0
    %378 = vmatpush1.msra.mxu0 %v203
    %379 = vmatprep.subr.mxu0 0.0
    %380 = vmatpush1.msra.mxu0 %v204
    %381 = vmatprep.subr.mxu0 0.0
    %382 = vmatpush1.msra.mxu0 %v205
    %383 = vmatprep.subr.mxu0 0.0
    %384 = vmatpush1.msra.mxu0 0.0
    %385 = vmatprep.subr.mxu0 0.0
    %386 = vmatpush1.msra.mxu0 0.0
    %387 = vmatprep.subr.mxu0 0.0
    %388 = vmatpush1.msra.mxu0 0.0
    %389 = vmatprep.subr.mxu0 0.0
    %390 = vmatpush1.msra.mxu0 0.0
    %391 = vmatprep.subr.mxu0 0.0
    %392 = vmatpush1.msra.mxu0 0.0
    %393 = vmatprep.subr.mxu0 0.0
    %394 = vmatpush1.msra.mxu0 0.0
    %395 = vmatprep.subr.mxu0 0.0
    %396 = vmatpush1.msra.mxu0 0.0
    %397 = vmatprep.subr.mxu0 0.0
    %398 = vmatpush1.msra.mxu0 0.0
    %399 = vmatprep.subr.mxu0 0.0
    %400 = vmatpush1.msra.mxu0 0.0
    %401 = vmatprep.subr.mxu0 0.0
    %402 = vmatpush1.msra.mxu0 0.0
    %403 = vmatprep.subr.mxu0 0.0
    %404 = vmatpush1.msra.mxu0 0.0
    %405 = vmatprep.subr.mxu0 0.0
    %406 = vmatpush1.msra.mxu0 0.0
    %407 = vmatprep.subr.mxu0 0.0
    %408 = vmatpush1.msra.mxu0 0.0
    %409 = vmatprep.subr.mxu0 0.0
    %410 = vmatpush1.msra.mxu0 0.0
    %411 = vmatprep.subr.mxu0 0.0
    %412 = vmatpush1.msra.mxu0 0.0
    %413 = vmatprep.subr.mxu0 0.0
    %414 = vmatpush1.msra.mxu0 0.0
    %415 = vmatprep.subr.mxu0 0.0
    %416 = vmatpush1.msra.mxu0 0.0
    %417 = vmatprep.subr.mxu0 0.0
    %418 = vmatpush1.msra.mxu0 0.0
    %419 = vmatprep.subr.mxu0 0.0
    %420 = vmatpush1.msra.mxu0 0.0
    %421 = vmatprep.subr.mxu0 0.0
    %422 = vmatpush1.msra.mxu0 0.0
    %423 = vmatprep.subr.mxu0 0.0
    %424 = vmatpush1.msra.mxu0 0.0
    %425 = vmatprep.subr.mxu0 0.0
    %426 = vmatpush1.msra.mxu0 0.0
    %427 = vmatprep.subr.mxu0 0.0
    %428 = vmatpush1.msra.mxu0 0.0
    %429 = vmatprep.subr.mxu0 0.0
    %430 = vmatpush1.msra.mxu0 0.0
    %431 = vmatprep.mubr.f32.mxu0 0.0
    %432 = vmatmul.mubr.f32.gmra.mrb[0].mxu0 %v344
    %v433 = vpop.f32.mrb[0].mxu0
    %v434 = vadd.f32 %v305, %v433
    %v435 = vpop.f32.mrb[0].mxu0
    %436 = vmatprep.mubr.f32.mxu0 0.0
    %437 = vmatmul.mubr.f32.gmra.mrb[0].mxu0 %v347
    %v438 = vpop.f32.mrb[0].mxu0
    %v439 = vadd.f32 %v310, %v438
    %v440 = vpop.f32.mrb[0].mxu0
    %441 = vmatprep.mubr.f32.mxu0 0.0
    %442 = vmatmul.mubr.f32.gmra.mrb[0].mxu0 %v350
    %v443 = vpop.f32.mrb[0].mxu0
    %v444 = vadd.f32 %v315, %v443
    %v445 = vpop.f32.mrb[0].mxu0
    %446 = vmatprep.mubr.f32.mxu0 0.0
    %447 = vmatmul.mubr.f32.gmra.mrb[0].mxu0 %v353
    %v448 = vpop.f32.mrb[0].mxu0
    %v449 = vadd.f32 %v320, %v448
    %v450 = vpop.f32.mrb[0].mxu0
    %451 = vmatprep.mubr.f32.mxu0 0.0
    %452 = vmatmul.mubr.f32.gmra.mrb[0].mxu0 %v356
    %v453 = vpop.f32.mrb[0].mxu0
    %v454 = vadd.f32 %v325, %v453
    %v455 = vpop.f32.mrb[0].mxu0
    %456 = vmatprep.mubr.f32.mxu0 0.0
    %457 = vmatmul.mubr.f32.gmra.mrb[0].mxu0 %v359
    %v458 = vpop.f32.mrb[0].mxu0
    %v459 = vadd.f32 %v330, %v458
    %v460 = vpop.f32.mrb[0].mxu0
    %461 = vmatprep.mubr.f32.mxu0 0.0
    %462 = vmatmul.mubr.f32.gmra.mrb[0].mxu0 %v362
    %v463 = vpop.f32.mrb[0].mxu0
    %v464 = vadd.f32 %v335, %v463
    %v465 = vpop.f32.mrb[0].mxu0
    %466 = vmatprep.mubr.f32.mxu0 0.0
    %467 = vmatmul.mubr.f32.gmra.mrb[0].mxu0 %v365
    %v468 = vpop.f32.mrb[0].mxu0
    %v469 = vadd.f32 %v340, %v468
    %v470 = vpop.f32.mrb[0].mxu0
    %471 = vdwg.mxu0
    %v472 = vmax.f32 %v434, 0.0
    %v473 = vmax.f32 %v439, 0.0
    %v474 = vmax.f32 %v444, 0.0
    %v475 = vmax.f32 %v449, 0.0
    %v476 = vmax.f32 %v454, 0.0
    %v477 = vmax.f32 %v459, 0.0
    %v478 = vmax.f32 %v464, 0.0
    %v479 = vmax.f32 %v469, 0.0
    %481 = vset.pattern.permute.xlu0 0
    %482 = vperm.xlu0 %481, %v270
    %v483 = vpop.permute.xlu0 %482
    %486 = vset.pattern.permute.xlu0 0
    %487 = vperm.xlu0 %486, %v271
    %v488 = vpop.permute.xlu0 %487
    %491 = vset.pattern.permute.xlu0 0
    %492 = vperm.xlu0 %491, %v272
    %v493 = vpop.permute.xlu0 %492
    %496 = vset.pattern.permute.xlu0 0
    %497 = vperm.xlu0 %496, %v273
    %v498 = vpop.permute.xlu0 %497
    %501 = vset.pattern.permute.xlu0 0
    %502 = vperm.xlu0 %501, %v274
    %v503 = vpop.permute.xlu0 %502
    %506 = vset.pattern.permute.xlu0 0
    %507 = vperm.xlu0 %506, %v275
    %v508 = vpop.permute.xlu0 %507
    %511 = vset.pattern.permute.xlu0 0
    %512 = vperm.xlu0 %511, %v276
    %v513 = vpop.permute.xlu0 %512
    %516 = vset.pattern.permute.xlu0 0
    %517 = vperm.xlu0 %516, %v277
    %v518 = vpop.permute.xlu0 %517
    %v520 = vmul.f32 %v483, %v472
    %v521 = vmul.f32 %v488, %v473
    %v522 = vmul.f32 %v493, %v474
    %v523 = vmul.f32 %v498, %v475
    %v524 = vmul.f32 %v503, %v476
    %v525 = vmul.f32 %v508, %v477
    %v526 = vmul.f32 %v513, %v478
    %v527 = vmul.f32 %v518, %v479
    %v528 = vadd.f32 %v520, %v521
    %v529 = vadd.f32 %v528, %v522
    %v530 = vadd.f32 %v529, %v523
    %v531 = vadd.f32 %v530, %v524
    %v532 = vadd.f32 %v531, %v525
    %v533 = vadd.f32 %v532, %v526
    %v534 = vadd.f32 %v533, %v527
    %v535 = vrot.slane %v534, 4
    %v536 = vadd.f32 %v534, %v535
    %v537 = vrot.slane %v536, 2
    %v538 = vadd.f32 %v536, %v537
    %v539 = vrot.slane %v538, 1
    %v540 = vadd.f32 %v538, %v539
    %v541 = vadd.f32 %v540, 0.0
    %543 = vset.pattern.permute.xlu0 0
    %544 = vperm.xlu0 %543, %v246
    %v545 = vpop.permute.xlu0 %544
    %548 = vset.pattern.permute.xlu0 0
    %549 = vperm.xlu0 %548, %v247
    %v550 = vpop.permute.xlu0 %549
    %553 = vset.pattern.permute.xlu0 0
    %554 = vperm.xlu0 %553, %v248
    %v555 = vpop.permute.xlu0 %554
    %558 = vset.pattern.permute.xlu0 0
    %559 = vperm.xlu0 %558, %v249
    %v560 = vpop.permute.xlu0 %559
    %563 = vset.pattern.permute.xlu0 0
    %564 = vperm.xlu0 %563, %v250
    %v565 = vpop.permute.xlu0 %564
    %568 = vset.pattern.permute.xlu0 0
    %569 = vperm.xlu0 %568, %v251
    %v570 = vpop.permute.xlu0 %569
    %573 = vset.pattern.permute.xlu0 0
    %574 = vperm.xlu0 %573, %v252
    %v575 = vpop.permute.xlu0 %574
    %578 = vset.pattern.permute.xlu0 0
    %579 = vperm.xlu0 %578, %v253
    %v580 = vpop.permute.xlu0 %579
    %v583 = vsel %vm342, %v214, 0
    %v586 = vsel %vm342, %v215, 0
    %v589 = vsel %vm342, %v216, 0
    %v592 = vsel %vm342, %v217, 0
    %v595 = vsel %vm342, %v218, 0
    %v598 = vsel %vm342, %v219, 0
    %v601 = vsel %vm342, %v220, 0
    %v604 = vsel %vm342, %v221, 0
    %606 = vmatprep.subr.mxu0 0.0
    %607 = vmatpush1.msra.mxu0 %v198
    %608 = vmatprep.subr.mxu0 0.0
    %609 = vmatpush1.msra.mxu0 %v199
    %610 = vmatprep.subr.mxu0 0.0
    %611 = vmatpush1.msra.mxu0 %v200
    %612 = vmatprep.subr.mxu0 0.0
    %613 = vmatpush1.msra.mxu0 %v201
    %614 = vmatprep.subr.mxu0 0.0
    %615 = vmatpush1.msra.mxu0 %v202
    %616 = vmatprep.subr.mxu0 0.0
    %617 = vmatpush1.msra.mxu0 %v203
    %618 = vmatprep.subr.mxu0 0.0
    %619 = vmatpush1.msra.mxu0 %v204
    %620 = vmatprep.subr.mxu0 0.0
    %621 = vmatpush1.msra.mxu0 %v205
    %622 = vmatprep.subr.mxu0 0.0
    %623 = vmatpush1.msra.mxu0 0.0
    %624 = vmatprep.subr.mxu0 0.0
    %625 = vmatpush1.msra.mxu0 0.0
    %626 = vmatprep.subr.mxu0 0.0
    %627 = vmatpush1.msra.mxu0 0.0
    %628 = vmatprep.subr.mxu0 0.0
    %629 = vmatpush1.msra.mxu0 0.0
    %630 = vmatprep.subr.mxu0 0.0
    %631 = vmatpush1.msra.mxu0 0.0
    %632 = vmatprep.subr.mxu0 0.0
    %633 = vmatpush1.msra.mxu0 0.0
    %634 = vmatprep.subr.mxu0 0.0
    %635 = vmatpush1.msra.mxu0 0.0
    %636 = vmatprep.subr.mxu0 0.0
    %637 = vmatpush1.msra.mxu0 0.0
    %638 = vmatprep.subr.mxu0 0.0
    %639 = vmatpush1.msra.mxu0 0.0
    %640 = vmatprep.subr.mxu0 0.0
    %641 = vmatpush1.msra.mxu0 0.0
    %642 = vmatprep.subr.mxu0 0.0
    %643 = vmatpush1.msra.mxu0 0.0
    %644 = vmatprep.subr.mxu0 0.0
    %645 = vmatpush1.msra.mxu0 0.0
    %646 = vmatprep.subr.mxu0 0.0
    %647 = vmatpush1.msra.mxu0 0.0
    %648 = vmatprep.subr.mxu0 0.0
    %649 = vmatpush1.msra.mxu0 0.0
    %650 = vmatprep.subr.mxu0 0.0
    %651 = vmatpush1.msra.mxu0 0.0
    %652 = vmatprep.subr.mxu0 0.0
    %653 = vmatpush1.msra.mxu0 0.0
    %654 = vmatprep.subr.mxu0 0.0
    %655 = vmatpush1.msra.mxu0 0.0
    %656 = vmatprep.subr.mxu0 0.0
    %657 = vmatpush1.msra.mxu0 0.0
    %658 = vmatprep.subr.mxu0 0.0
    %659 = vmatpush1.msra.mxu0 0.0
    %660 = vmatprep.subr.mxu0 0.0
    %661 = vmatpush1.msra.mxu0 0.0
    %662 = vmatprep.subr.mxu0 0.0
    %663 = vmatpush1.msra.mxu0 0.0
    %664 = vmatprep.subr.mxu0 0.0
    %665 = vmatpush1.msra.mxu0 0.0
    %666 = vmatprep.subr.mxu0 0.0
    %667 = vmatpush1.msra.mxu0 0.0
    %668 = vmatprep.subr.mxu0 0.0
    %669 = vmatpush1.msra.mxu0 0.0
    %670 = vmatprep.mubr.f32.mxu0 0.0
    %671 = vmatmul.mubr.f32.gmra.mrb[0].mxu0 %v583
    %v672 = vpop.f32.mrb[0].mxu0
    %v673 = vadd.f32 %v545, %v672
    %v674 = vpop.f32.mrb[0].mxu0
    %675 = vmatprep.mubr.f32.mxu0 0.0
    %676 = vmatmul.mubr.f32.gmra.mrb[0].mxu0 %v586
    %v677 = vpop.f32.mrb[0].mxu0
    %v678 = vadd.f32 %v550, %v677
    %v679 = vpop.f32.mrb[0].mxu0
    %680 = vmatprep.mubr.f32.mxu0 0.0
    %681 = vmatmul.mubr.f32.gmra.mrb[0].mxu0 %v589
    %v682 = vpop.f32.mrb[0].mxu0
    %v683 = vadd.f32 %v555, %v682
    %v684 = vpop.f32.mrb[0].mxu0
    %685 = vmatprep.mubr.f32.mxu0 0.0
    %686 = vmatmul.mubr.f32.gmra.mrb[0].mxu0 %v592
    %v687 = vpop.f32.mrb[0].mxu0
    %v688 = vadd.f32 %v560, %v687
    %v689 = vpop.f32.mrb[0].mxu0
    %690 = vmatprep.mubr.f32.mxu0 0.0
    %691 = vmatmul.mubr.f32.gmra.mrb[0].mxu0 %v595
    %v692 = vpop.f32.mrb[0].mxu0
    %v693 = vadd.f32 %v565, %v692
    %v694 = vpop.f32.mrb[0].mxu0
    %695 = vmatprep.mubr.f32.mxu0 0.0
    %696 = vmatmul.mubr.f32.gmra.mrb[0].mxu0 %v598
    %v697 = vpop.f32.mrb[0].mxu0
    %v698 = vadd.f32 %v570, %v697
    %v699 = vpop.f32.mrb[0].mxu0
    %700 = vmatprep.mubr.f32.mxu0 0.0
    %701 = vmatmul.mubr.f32.gmra.mrb[0].mxu0 %v601
    %v702 = vpop.f32.mrb[0].mxu0
    %v703 = vadd.f32 %v575, %v702
    %v704 = vpop.f32.mrb[0].mxu0
    %705 = vmatprep.mubr.f32.mxu0 0.0
    %706 = vmatmul.mubr.f32.gmra.mrb[0].mxu0 %v604
    %v707 = vpop.f32.mrb[0].mxu0
    %v708 = vadd.f32 %v580, %v707
    %v709 = vpop.f32.mrb[0].mxu0
    %710 = vdwg.mxu0
    %v711 = vmax.f32 %v673, 0.0
    %v712 = vmax.f32 %v678, 0.0
    %v713 = vmax.f32 %v683, 0.0
    %v714 = vmax.f32 %v688, 0.0
    %v715 = vmax.f32 %v693, 0.0
    %v716 = vmax.f32 %v698, 0.0
    %v717 = vmax.f32 %v703, 0.0
    %v718 = vmax.f32 %v708, 0.0
    %720 = vset.pattern.permute.xlu0 0
    %721 = vperm.xlu0 %720, %v278
    %v722 = vpop.permute.xlu0 %721
    %725 = vset.pattern.permute.xlu0 0
    %726 = vperm.xlu0 %725, %v279
    %v727 = vpop.permute.xlu0 %726
    %730 = vset.pattern.permute.xlu0 0
    %731 = vperm.xlu0 %730, %v280
    %v732 = vpop.permute.xlu0 %731
    %735 = vset.pattern.permute.xlu0 0
    %736 = vperm.xlu0 %735, %v281
    %v737 = vpop.permute.xlu0 %736
    %740 = vset.pattern.permute.xlu0 0
    %741 = vperm.xlu0 %740, %v282
    %v742 = vpop.permute.xlu0 %741
    %745 = vset.pattern.permute.xlu0 0
    %746 = vperm.xlu0 %745, %v283
    %v747 = vpop.permute.xlu0 %746
    %750 = vset.pattern.permute.xlu0 0
    %751 = vperm.xlu0 %750, %v284
    %v752 = vpop.permute.xlu0 %751
    %755 = vset.pattern.permute.xlu0 0
    %756 = vperm.xlu0 %755, %v285
    %v757 = vpop.permute.xlu0 %756
    %v759 = vmul.f32 %v722, %v711
    %v760 = vmul.f32 %v727, %v712
    %v761 = vmul.f32 %v732, %v713
    %v762 = vmul.f32 %v737, %v714
    %v763 = vmul.f32 %v742, %v715
    %v764 = vmul.f32 %v747, %v716
    %v765 = vmul.f32 %v752, %v717
    %v766 = vmul.f32 %v757, %v718
    %v767 = vadd.f32 %v759, %v760
    %v768 = vadd.f32 %v767, %v761
    %v769 = vadd.f32 %v768, %v762
    %v770 = vadd.f32 %v769, %v763
    %v771 = vadd.f32 %v770, %v764
    %v772 = vadd.f32 %v771, %v765
    %v773 = vadd.f32 %v772, %v766
    %v774 = vrot.slane %v773, 4
    %v775 = vadd.f32 %v773, %v774
    %v776 = vrot.slane %v775, 2
    %v777 = vadd.f32 %v775, %v776
    %v778 = vrot.slane %v777, 1
    %v779 = vadd.f32 %v777, %v778
    %v780 = vadd.f32 %v541, %v779
    %782 = vset.pattern.permute.xlu0 0
    %783 = vperm.xlu0 %782, %v254
    %v784 = vpop.permute.xlu0 %783
    %787 = vset.pattern.permute.xlu0 0
    %788 = vperm.xlu0 %787, %v255
    %v789 = vpop.permute.xlu0 %788
    %792 = vset.pattern.permute.xlu0 0
    %793 = vperm.xlu0 %792, %v256
    %v794 = vpop.permute.xlu0 %793
    %797 = vset.pattern.permute.xlu0 0
    %798 = vperm.xlu0 %797, %v257
    %v799 = vpop.permute.xlu0 %798
    %802 = vset.pattern.permute.xlu0 0
    %803 = vperm.xlu0 %802, %v258
    %v804 = vpop.permute.xlu0 %803
    %807 = vset.pattern.permute.xlu0 0
    %808 = vperm.xlu0 %807, %v259
    %v809 = vpop.permute.xlu0 %808
    %812 = vset.pattern.permute.xlu0 0
    %813 = vperm.xlu0 %812, %v260
    %v814 = vpop.permute.xlu0 %813
    %817 = vset.pattern.permute.xlu0 0
    %818 = vperm.xlu0 %817, %v261
    %v819 = vpop.permute.xlu0 %818
    %v822 = vsel %vm342, %v222, 0
    %v825 = vsel %vm342, %v223, 0
    %v828 = vsel %vm342, %v224, 0
    %v831 = vsel %vm342, %v225, 0
    %v834 = vsel %vm342, %v226, 0
    %v837 = vsel %vm342, %v227, 0
    %v840 = vsel %vm342, %v228, 0
    %v843 = vsel %vm342, %v229, 0
    %845 = vmatprep.subr.mxu0 0.0
    %846 = vmatpush1.msra.mxu0 %v198
    %847 = vmatprep.subr.mxu0 0.0
    %848 = vmatpush1.msra.mxu0 %v199
    %849 = vmatprep.subr.mxu0 0.0
    %850 = vmatpush1.msra.mxu0 %v200
    %851 = vmatprep.subr.mxu0 0.0
    %852 = vmatpush1.msra.mxu0 %v201
    %853 = vmatprep.subr.mxu0 0.0
    %854 = vmatpush1.msra.mxu0 %v202
    %855 = vmatprep.subr.mxu0 0.0
    %856 = vmatpush1.msra.mxu0 %v203
    %857 = vmatprep.subr.mxu0 0.0
    %858 = vmatpush1.msra.mxu0 %v204
    %859 = vmatprep.subr.mxu0 0.0
    %860 = vmatpush1.msra.mxu0 %v205
    %861 = vmatprep.subr.mxu0 0.0
    %862 = vmatpush1.msra.mxu0 0.0
    %863 = vmatprep.subr.mxu0 0.0
    %864 = vmatpush1.msra.mxu0 0.0
    %865 = vmatprep.subr.mxu0 0.0
    %866 = vmatpush1.msra.mxu0 0.0
    %867 = vmatprep.subr.mxu0 0.0
    %868 = vmatpush1.msra.mxu0 0.0
    %869 = vmatprep.subr.mxu0 0.0
    %870 = vmatpush1.msra.mxu0 0.0
    %871 = vmatprep.subr.mxu0 0.0
    %872 = vmatpush1.msra.mxu0 0.0
    %873 = vmatprep.subr.mxu0 0.0
    %874 = vmatpush1.msra.mxu0 0.0
    %875 = vmatprep.subr.mxu0 0.0
    %876 = vmatpush1.msra.mxu0 0.0
    %877 = vmatprep.subr.mxu0 0.0
    %878 = vmatpush1.msra.mxu0 0.0
    %879 = vmatprep.subr.mxu0 0.0
    %880 = vmatpush1.msra.mxu0 0.0
    %881 = vmatprep.subr.mxu0 0.0
    %882 = vmatpush1.msra.mxu0 0.0
    %883 = vmatprep.subr.mxu0 0.0
    %884 = vmatpush1.msra.mxu0 0.0
    %885 = vmatprep.subr.mxu0 0.0
    %886 = vmatpush1.msra.mxu0 0.0
    %887 = vmatprep.subr.mxu0 0.0
    %888 = vmatpush1.msra.mxu0 0.0
    %889 = vmatprep.subr.mxu0 0.0
    %890 = vmatpush1.msra.mxu0 0.0
    %891 = vmatprep.subr.mxu0 0.0
    %892 = vmatpush1.msra.mxu0 0.0
    %893 = vmatprep.subr.mxu0 0.0
    %894 = vmatpush1.msra.mxu0 0.0
    %895 = vmatprep.subr.mxu0 0.0
    %896 = vmatpush1.msra.mxu0 0.0
    %897 = vmatprep.subr.mxu0 0.0
    %898 = vmatpush1.msra.mxu0 0.0
    %899 = vmatprep.subr.mxu0 0.0
    %900 = vmatpush1.msra.mxu0 0.0
    %901 = vmatprep.subr.mxu0 0.0
    %902 = vmatpush1.msra.mxu0 0.0
    %903 = vmatprep.subr.mxu0 0.0
    %904 = vmatpush1.msra.mxu0 0.0
    %905 = vmatprep.subr.mxu0 0.0
    %906 = vmatpush1.msra.mxu0 0.0
    %907 = vmatprep.subr.mxu0 0.0
    %908 = vmatpush1.msra.mxu0 0.0
    %909 = vmatprep.mubr.f32.mxu0 0.0
    %910 = vmatmul.mubr.f32.gmra.mrb[0].mxu0 %v822
    %v911 = vpop.f32.mrb[0].mxu0
    %v912 = vadd.f32 %v784, %v911
    %v913 = vpop.f32.mrb[0].mxu0
    %914 = vmatprep.mubr.f32.mxu0 0.0
    %915 = vmatmul.mubr.f32.gmra.mrb[0].mxu0 %v825
    %v916 = vpop.f32.mrb[0].mxu0
    %v917 = vadd.f32 %v789, %v916
    %v918 = vpop.f32.mrb[0].mxu0
    %919 = vmatprep.mubr.f32.mxu0 0.0
    %920 = vmatmul.mubr.f32.gmra.mrb[0].mxu0 %v828
    %v921 = vpop.f32.mrb[0].mxu0
    %v922 = vadd.f32 %v794, %v921
    %v923 = vpop.f32.mrb[0].mxu0
    %924 = vmatprep.mubr.f32.mxu0 0.0
    %925 = vmatmul.mubr.f32.gmra.mrb[0].mxu0 %v831
    %v926 = vpop.f32.mrb[0].mxu0
    %v927 = vadd.f32 %v799, %v926
    %v928 = vpop.f32.mrb[0].mxu0
    %929 = vmatprep.mubr.f32.mxu0 0.0
    %930 = vmatmul.mubr.f32.gmra.mrb[0].mxu0 %v834
    %v931 = vpop.f32.mrb[0].mxu0
    %v932 = vadd.f32 %v804, %v931
    %v933 = vpop.f32.mrb[0].mxu0
    %934 = vmatprep.mubr.f32.mxu0 0.0
    %935 = vmatmul.mubr.f32.gmra.mrb[0].mxu0 %v837
    %v936 = vpop.f32.mrb[0].mxu0
    %v937 = vadd.f32 %v809, %v936
    %v938 = vpop.f32.mrb[0].mxu0
    %939 = vmatprep.mubr.f32.mxu0 0.0
    %940 = vmatmul.mubr.f32.gmra.mrb[0].mxu0 %v840
    %v941 = vpop.f32.mrb[0].mxu0
    %v942 = vadd.f32 %v814, %v941
    %v943 = vpop.f32.mrb[0].mxu0
    %944 = vmatprep.mubr.f32.mxu0 0.0
    %945 = vmatmul.mubr.f32.gmra.mrb[0].mxu0 %v843
    %v946 = vpop.f32.mrb[0].mxu0
    %v947 = vadd.f32 %v819, %v946
    %v948 = vpop.f32.mrb[0].mxu0
    %949 = vdwg.mxu0
    %v950 = vmax.f32 %v912, 0.0
    %v951 = vmax.f32 %v917, 0.0
    %v952 = vmax.f32 %v922, 0.0
    %v953 = vmax.f32 %v927, 0.0
    %v954 = vmax.f32 %v932, 0.0
    %v955 = vmax.f32 %v937, 0.0
    %v956 = vmax.f32 %v942, 0.0
    %v957 = vmax.f32 %v947, 0.0
    %959 = vset.pattern.permute.xlu0 0
    %960 = vperm.xlu0 %959, %v286
    %v961 = vpop.permute.xlu0 %960
    %964 = vset.pattern.permute.xlu0 0
    %965 = vperm.xlu0 %964, %v287
    %v966 = vpop.permute.xlu0 %965
    %969 = vset.pattern.permute.xlu0 0
    %970 = vperm.xlu0 %969, %v288
    %v971 = vpop.permute.xlu0 %970
    %974 = vset.pattern.permute.xlu0 0
    %975 = vperm.xlu0 %974, %v289
    %v976 = vpop.permute.xlu0 %975
    %979 = vset.pattern.permute.xlu0 0
    %980 = vperm.xlu0 %979, %v290
    %v981 = vpop.permute.xlu0 %980
    %984 = vset.pattern.permute.xlu0 0
    %985 = vperm.xlu0 %984, %v291
    %v986 = vpop.permute.xlu0 %985
    %989 = vset.pattern.permute.xlu0 0
    %990 = vperm.xlu0 %989, %v292
    %v991 = vpop.permute.xlu0 %990
    %994 = vset.pattern.permute.xlu0 0
    %995 = vperm.xlu0 %994, %v293
    %v996 = vpop.permute.xlu0 %995
    %v998 = vmul.f32 %v961, %v950
    %v999 = vmul.f32 %v966, %v951
    %v1000 = vmul.f32 %v971, %v952
    %v1001 = vmul.f32 %v976, %v953
    %v1002 = vmul.f32 %v981, %v954
    %v1003 = vmul.f32 %v986, %v955
    %v1004 = vmul.f32 %v991, %v956
    %v1005 = vmul.f32 %v996, %v957
    %v1006 = vadd.f32 %v998, %v999
    %v1007 = vadd.f32 %v1006, %v1000
    %v1008 = vadd.f32 %v1007, %v1001
    %v1009 = vadd.f32 %v1008, %v1002
    %v1010 = vadd.f32 %v1009, %v1003
    %v1011 = vadd.f32 %v1010, %v1004
    %v1012 = vadd.f32 %v1011, %v1005
    %v1013 = vrot.slane %v1012, 4
    %v1014 = vadd.f32 %v1012, %v1013
    %v1015 = vrot.slane %v1014, 2
    %v1016 = vadd.f32 %v1014, %v1015
    %v1017 = vrot.slane %v1016, 1
    %v1018 = vadd.f32 %v1016, %v1017
    %v1019 = vadd.f32 %v780, %v1018
    %1021 = vset.pattern.permute.xlu0 0
    %1022 = vperm.xlu0 %1021, %v262
    %v1023 = vpop.permute.xlu0 %1022
    %1026 = vset.pattern.permute.xlu0 0
    %1027 = vperm.xlu0 %1026, %v263
    %v1028 = vpop.permute.xlu0 %1027
    %1031 = vset.pattern.permute.xlu0 0
    %1032 = vperm.xlu0 %1031, %v264
    %v1033 = vpop.permute.xlu0 %1032
    %1036 = vset.pattern.permute.xlu0 0
    %1037 = vperm.xlu0 %1036, %v265
    %v1038 = vpop.permute.xlu0 %1037
    %1041 = vset.pattern.permute.xlu0 0
    %1042 = vperm.xlu0 %1041, %v266
    %v1043 = vpop.permute.xlu0 %1042
    %1046 = vset.pattern.permute.xlu0 0
    %1047 = vperm.xlu0 %1046, %v267
    %v1048 = vpop.permute.xlu0 %1047
    %1051 = vset.pattern.permute.xlu0 0
    %1052 = vperm.xlu0 %1051, %v268
    %v1053 = vpop.permute.xlu0 %1052
    %1056 = vset.pattern.permute.xlu0 0
    %1057 = vperm.xlu0 %1056, %v269
    %v1058 = vpop.permute.xlu0 %1057
    %v1061 = vsel %vm342, %v230, 0
    %v1064 = vsel %vm342, %v231, 0
    %v1067 = vsel %vm342, %v232, 0
    %v1070 = vsel %vm342, %v233, 0
    %v1073 = vsel %vm342, %v234, 0
    %v1076 = vsel %vm342, %v235, 0
    %v1079 = vsel %vm342, %v236, 0
    %v1082 = vsel %vm342, %v237, 0
    %1084 = vmatprep.subr.mxu0 0.0
    %1085 = vmatpush1.msra.mxu0 %v198
    %1086 = vmatprep.subr.mxu0 0.0
    %1087 = vmatpush1.msra.mxu0 %v199
    %1088 = vmatprep.subr.mxu0 0.0
    %1089 = vmatpush1.msra.mxu0 %v200
    %1090 = vmatprep.subr.mxu0 0.0
    %1091 = vmatpush1.msra.mxu0 %v201
    %1092 = vmatprep.subr.mxu0 0.0
    %1093 = vmatpush1.msra.mxu0 %v202
    %1094 = vmatprep.subr.mxu0 0.0
    %1095 = vmatpush1.msra.mxu0 %v203
    %1096 = vmatprep.subr.mxu0 0.0
    %1097 = vmatpush1.msra.mxu0 %v204
    %1098 = vmatprep.subr.mxu0 0.0
    %1099 = vmatpush1.msra.mxu0 %v205
    %1100 = vmatprep.subr.mxu0 0.0
    %1101 = vmatpush1.msra.mxu0 0.0
    %1102 = vmatprep.subr.mxu0 0.0
    %1103 = vmatpush1.msra.mxu0 0.0
    %1104 = vmatprep.subr.mxu0 0.0
    %1105 = vmatpush1.msra.mxu0 0.0
    %1106 = vmatprep.subr.mxu0 0.0
    %1107 = vmatpush1.msra.mxu0 0.0
    %1108 = vmatprep.subr.mxu0 0.0
    %1109 = vmatpush1.msra.mxu0 0.0
    %1110 = vmatprep.subr.mxu0 0.0
    %1111 = vmatpush1.msra.mxu0 0.0
    %1112 = vmatprep.subr.mxu0 0.0
    %1113 = vmatpush1.msra.mxu0 0.0
    %1114 = vmatprep.subr.mxu0 0.0
    %1115 = vmatpush1.msra.mxu0 0.0
    %1116 = vmatprep.subr.mxu0 0.0
    %1117 = vmatpush1.msra.mxu0 0.0
    %1118 = vmatprep.subr.mxu0 0.0
    %1119 = vmatpush1.msra.mxu0 0.0
    %1120 = vmatprep.subr.mxu0 0.0
    %1121 = vmatpush1.msra.mxu0 0.0
    %1122 = vmatprep.subr.mxu0 0.0
    %1123 = vmatpush1.msra.mxu0 0.0
    %1124 = vmatprep.subr.mxu0 0.0
    %1125 = vmatpush1.msra.mxu0 0.0
    %1126 = vmatprep.subr.mxu0 0.0
    %1127 = vmatpush1.msra.mxu0 0.0
    %1128 = vmatprep.subr.mxu0 0.0
    %1129 = vmatpush1.msra.mxu0 0.0
    %1130 = vmatprep.subr.mxu0 0.0
    %1131 = vmatpush1.msra.mxu0 0.0
    %1132 = vmatprep.subr.mxu0 0.0
    %1133 = vmatpush1.msra.mxu0 0.0
    %1134 = vmatprep.subr.mxu0 0.0
    %1135 = vmatpush1.msra.mxu0 0.0
    %1136 = vmatprep.subr.mxu0 0.0
    %1137 = vmatpush1.msra.mxu0 0.0
    %1138 = vmatprep.subr.mxu0 0.0
    %1139 = vmatpush1.msra.mxu0 0.0
    %1140 = vmatprep.subr.mxu0 0.0
    %1141 = vmatpush1.msra.mxu0 0.0
    %1142 = vmatprep.subr.mxu0 0.0
    %1143 = vmatpush1.msra.mxu0 0.0
    %1144 = vmatprep.subr.mxu0 0.0
    %1145 = vmatpush1.msra.mxu0 0.0
    %1146 = vmatprep.subr.mxu0 0.0
    %1147 = vmatpush1.msra.mxu0 0.0
    %1148 = vmatprep.mubr.f32.mxu0 0.0
    %1149 = vmatmul.mubr.f32.gmra.mrb[0].mxu0 %v1061
    %v1150 = vpop.f32.mrb[0].mxu0
    %v1151 = vadd.f32 %v1023, %v1150
    %v1152 = vpop.f32.mrb[0].mxu0
    %1153 = vmatprep.mubr.f32.mxu0 0.0
    %1154 = vmatmul.mubr.f32.gmra.mrb[0].mxu0 %v1064
    %v1155 = vpop.f32.mrb[0].mxu0
    %v1156 = vadd.f32 %v1028, %v1155
    %v1157 = vpop.f32.mrb[0].mxu0
    %1158 = vmatprep.mubr.f32.mxu0 0.0
    %1159 = vmatmul.mubr.f32.gmra.mrb[0].mxu0 %v1067
    %v1160 = vpop.f32.mrb[0].mxu0
    %v1161 = vadd.f32 %v1033, %v1160
    %v1162 = vpop.f32.mrb[0].mxu0
    %1163 = vmatprep.mubr.f32.mxu0 0.0
    %1164 = vmatmul.mubr.f32.gmra.mrb[0].mxu0 %v1070
    %v1165 = vpop.f32.mrb[0].mxu0
    %v1166 = vadd.f32 %v1038, %v1165
    %v1167 = vpop.f32.mrb[0].mxu0
    %1168 = vmatprep.mubr.f32.mxu0 0.0
    %1169 = vmatmul.mubr.f32.gmra.mrb[0].mxu0 %v1073
    %v1170 = vpop.f32.mrb[0].mxu0
    %v1171 = vadd.f32 %v1043, %v1170
    %v1172 = vpop.f32.mrb[0].mxu0
    %1173 = vmatprep.mubr.f32.mxu0 0.0
    %1174 = vmatmul.mubr.f32.gmra.mrb[0].mxu0 %v1076
    %v1175 = vpop.f32.mrb[0].mxu0
    %v1176 = vadd.f32 %v1048, %v1175
    %v1177 = vpop.f32.mrb[0].mxu0
    %1178 = vmatprep.mubr.f32.mxu0 0.0
    %1179 = vmatmul.mubr.f32.gmra.mrb[0].mxu0 %v1079
    %v1180 = vpop.f32.mrb[0].mxu0
    %v1181 = vadd.f32 %v1053, %v1180
    %v1182 = vpop.f32.mrb[0].mxu0
    %1183 = vmatprep.mubr.f32.mxu0 0.0
    %1184 = vmatmul.mubr.f32.gmra.mrb[0].mxu0 %v1082
    %v1185 = vpop.f32.mrb[0].mxu0
    %v1186 = vadd.f32 %v1058, %v1185
    %v1187 = vpop.f32.mrb[0].mxu0
    %1188 = vdwg.mxu0
    %v1189 = vmax.f32 %v1151, 0.0
    %v1190 = vmax.f32 %v1156, 0.0
    %v1191 = vmax.f32 %v1161, 0.0
    %v1192 = vmax.f32 %v1166, 0.0
    %v1193 = vmax.f32 %v1171, 0.0
    %v1194 = vmax.f32 %v1176, 0.0
    %v1195 = vmax.f32 %v1181, 0.0
    %v1196 = vmax.f32 %v1186, 0.0
    %1198 = vset.pattern.permute.xlu0 0
    %1199 = vperm.xlu0 %1198, %v294
    %v1200 = vpop.permute.xlu0 %1199
    %1203 = vset.pattern.permute.xlu0 0
    %1204 = vperm.xlu0 %1203, %v295
    %v1205 = vpop.permute.xlu0 %1204
    %1208 = vset.pattern.permute.xlu0 0
    %1209 = vperm.xlu0 %1208, %v296
    %v1210 = vpop.permute.xlu0 %1209
    %1213 = vset.pattern.permute.xlu0 0
    %1214 = vperm.xlu0 %1213, %v297
    %v1215 = vpop.permute.xlu0 %1214
    %1218 = vset.pattern.permute.xlu0 0
    %1219 = vperm.xlu0 %1218, %v298
    %v1220 = vpop.permute.xlu0 %1219
    %1223 = vset.pattern.permute.xlu0 0
    %1224 = vperm.xlu0 %1223, %v299
    %v1225 = vpop.permute.xlu0 %1224
    %1228 = vset.pattern.permute.xlu0 0
    %1229 = vperm.xlu0 %1228, %v300
    %v1230 = vpop.permute.xlu0 %1229
    %1233 = vset.pattern.permute.xlu0 0
    %1234 = vperm.xlu0 %1233, %v301
    %v1235 = vpop.permute.xlu0 %1234
    %v1237 = vmul.f32 %v1200, %v1189
    %v1238 = vmul.f32 %v1205, %v1190
    %v1239 = vmul.f32 %v1210, %v1191
    %v1240 = vmul.f32 %v1215, %v1192
    %v1241 = vmul.f32 %v1220, %v1193
    %v1242 = vmul.f32 %v1225, %v1194
    %v1243 = vmul.f32 %v1230, %v1195
    %v1244 = vmul.f32 %v1235, %v1196
    %v1245 = vadd.f32 %v1237, %v1238
    %v1246 = vadd.f32 %v1245, %v1239
    %v1247 = vadd.f32 %v1246, %v1240
    %v1248 = vadd.f32 %v1247, %v1241
    %v1249 = vadd.f32 %v1248, %v1242
    %v1250 = vadd.f32 %v1249, %v1243
    %v1251 = vadd.f32 %v1250, %v1244
    %v1252 = vrot.slane %v1251, 4
    %v1253 = vadd.f32 %v1251, %v1252
    %v1254 = vrot.slane %v1253, 2
    %v1255 = vadd.f32 %v1253, %v1254
    %v1256 = vrot.slane %v1255, 1
    %v1257 = vadd.f32 %v1255, %v1256
    %v1258 = vadd.f32 %v1019, %v1257
    %s1259 = sld [smem:[#allocation2]]
    %v1260 = vstv %s1259
    %v1261 = vadd.f32 %v1258, %v1260
    %1262 = vst [vmem:[#allocation3] sm:$0x1] %v1261
    // Predicated region
    $region30: #{tpu_custom_call.1} parent=1 // pred_check
      _
    $region31: #{tpu_custom_call.1} parent=1 // pred_check_branch
      %1264 = sbr.rel (0) target = $region33
    $region32: #{tpu_custom_call.1} parent=1 // pred_region
      %s1266 = ssub.s32 16, 16
      %1267 = vsyncadd [#allocation4], %s1266
      %s1269 = sshll.u32 [#allocation3], 4
      %s1270 = int_to_ptr.vmem [resolvable:$true] %s1269
      %1272 = dma.vmem_to_hbm [thread:$0]  %s1270, 16, %s7, [#allocation4]
    $region33: #{tpu_custom_call.1} parent=1 // pred_fallthru
      _
    // Predicated region
    $region34: #{tpu_custom_call.1} parent=1 // pred_check
      _
    $region35: #{tpu_custom_call.1} parent=1 // pred_check_branch
      %1274 = sbr.rel (0) target = $region37
    $region36: #{tpu_custom_call.1} parent=1 // pred_region
      %1275 = dma.done [#allocation4], 16
    $region37: #{tpu_custom_call.1} parent=1 // pred_fallthru
      _
    %1276 = vsyncpa [#allocation4], 1

</llo_original>
